<compile_context>
chip_gen: v7x
topology: tpu7x:2x2x1
jax: 0.10.0
libtpu: 0.0.40
codegen_flags: <defaults>
</compile_context>

<pallas_src>
import jax
import jax.numpy as jnp
from jax.experimental import pallas as pl
from jax.experimental.pallas import tpu as pltpu


def _round_up(x: int, m: int) -> int:
    return (x + m - 1) // m * m


def _pos_embed_kernel(idx_ref, t_ref, out_ref):
    # idx_ref : VMEM (tm, l_path)        int32 -- flattened (node, path) rows, streamed
    # t_ref   : VMEM (l_path, n1p, d_path) f32 -- resident (constant index_map), holds
    #                                            T[l] = scaler * pos_pad @ W_l
    # out_ref : VMEM (tm, d_path)        f32  -- one accumulator slab per tile
    tm, l_path = idx_ref.shape
    _, n1p, d_path = t_ref.shape

    # One iota, reused for every l (hoisted; JAX does not CSE broadcasts in loops).
    col = jax.lax.broadcasted_iota(jnp.int32, (tm, n1p), 1)      # (tm, n1p)

    acc = jnp.zeros((tm, d_path), jnp.float32)
    for l in range(l_path):                                      # small, unrolled
        sel = idx_ref[:, l:l + 1]                                # (tm, 1) int32
        onehot = (col == sel).astype(jnp.float32)                # (tm, n1p) exact one-hot
        # gather + sum fused on the MXU: onehot @ T_l  ->  (tm, d_path)
        acc = acc + jnp.dot(onehot, t_ref[l],
                            preferred_element_type=jnp.float32)
    out_ref[...] = acc.astype(out_ref.dtype)


def position_embedding(pos, paths, weight_t, scaler, *, tm=None):
    """Forward pass of PositionEmbedding.

    Args:
      pos:      [n_node, d_node] float32 node positions (g.ndata['pos']).
      paths:    [n_node, k_path, l_path] int32 indices in [0, n_node]
                (index n_node selects the appended zero row).
      weight_t: [d_node * l_path, d_path] float32 (transpose of torch Linear weight).
      scaler:   scalar float32 parameter.
      tm:       row tile (flattened node*path rows) for the Pallas kernel (auto if None).

    Returns:
      [n_node, k_path, d_path] float32 position embeddings.
    """
    n_node, d_node = pos.shape
    pn, k_path, l_path = paths.shape
    assert pn == n_node
    K, d_path = weight_t.shape
    assert K == d_node * l_path

    # ---- Wrapper-side precompute (tiny): scaled, projected, padded position table. ----
    # Row n_node of pos_pad is the appended zero row; rows are padded to a multiple of 128
    # (lane dim of the one-hot / MXU contraction dim).  Padding rows are zero, never indexed.
    n1p = _round_up(n_node + 1, 128)
    pos_pad = jnp.zeros((n1p, d_node), jnp.float32).at[:n_node].set(pos.astype(jnp.float32))
    w_split = weight_t.astype(jnp.float32).reshape(l_path, d_node, d_path)
    # T[l, r, :] = scaler * pos_pad[r, :] @ W_l   -> (l_path, n1p, d_path)
    t_tbl = jnp.einsum(
        "nd,ldp->lnp",
        pos_pad * jnp.asarray(scaler, jnp.float32),
        w_split,
        precision=jax.lax.Precision.HIGHEST,
        preferred_element_type=jnp.float32,
    )

    # ---- Fold k_path into the matmul M dimension: flatten (node, path) rows. ----
    n_rows = n_node * k_path
    idx = paths.reshape(n_rows, l_path).astype(jnp.int32)

    # ---- Row tile: large (amortize ~0.35us/step), capped by the (tm, n1p) footprint. ----
    if tm is None:
        tm = 2048
        tm = min(tm, max(8, _round_up(n_rows, 8)))
        # Keep the live one-hot + iota intermediates (2 * tm * n1p * 4 B) around <= 8 MiB.
        cap = max(8, ((8 << 20) // (n1p * 4 * 2)) // 8 * 8)
        tm = min(tm, cap)
        # >=2 grid steps only on 2-TensorCore parts (v7x) so "parallel" can shard across
        # cores; on single-TC v5e/v6e the grid is a serial loop -> biggest tile wins.
        kind = jax.devices()[0].device_kind.lower() if jax.devices() else ""
        if "v7" in kind:
            tm = min(tm, max(8, _round_up(-(-n_rows // 2), 8)))
    tm = max(8, _round_up(int(tm), 8))

    # Pad rows to a tile multiple; padded rows index the zero row -> zero output, sliced off.
    n_rows_p = _round_up(n_rows, tm)
    if n_rows_p != n_rows:
        fill = jnp.full((n_rows_p - n_rows, l_path), n_node, jnp.int32)
        idx = jnp.concatenate([idx, fill], axis=0)

    # ---- Explicit VMEM budget (resident table x2 buffers, streamed blocks x2, live
    #      one-hot / iota / accumulator), with headroom.  Keeps v5e's 16 MiB default safe
    #      and allows larger graphs on v6e/v7x without relying on defaults. ----
    est = (2 * t_tbl.size * 4
           + 2 * tm * l_path * 4
           + 2 * tm * d_path * 4
           + 2 * tm * n1p * 4
           + tm * d_path * 4)
    vmem_limit = min(max(int(est * 1.5) + (2 << 20), 16 << 20), 48 << 20)

    out_flat = pl.pallas_call(
        _pos_embed_kernel,
        out_shape=jax.ShapeDtypeStruct((n_rows_p, d_path), jnp.float32),
        grid_spec=pltpu.PrefetchScalarGridSpec(
            num_scalar_prefetch=0,
            grid=(n_rows_p // tm,),
            in_specs=[
                pl.BlockSpec((tm, l_path), lambda i: (i, 0)),           # path indices (streamed)
                pl.BlockSpec((l_path, n1p, d_path), lambda i: (0, 0, 0)),  # projected table (resident)
            ],
            out_specs=pl.BlockSpec((tm, d_path), lambda i: (i, 0)),
        ),
        compiler_params=pltpu.CompilerParams(
            dimension_semantics=("parallel",),
            vmem_limit_bytes=vmem_limit),
    )(idx, t_tbl)

    return out_flat[:n_rows].reshape(n_node, k_path, d_path)


if __name__ == "__main__":
    # Small, deterministic example shapes.
    n_node, d_node = 16, 8
    k_path, l_path = 8, 4
    d_path = 32
    K = d_node * l_path  # 32

    key = jax.random.PRNGKey(0)
    k_pos, k_paths, k_w = jax.random.split(key, 3)

    pos = jax.random.normal(k_pos, (n_node, d_node), jnp.float32)
    # Indices in [0, n_node]; n_node is the appended zero (padding) row.
    paths = jax.random.randint(k_paths, (n_node, k_path, l_path), 0, n_node + 1,
                               dtype=jnp.int32)

    # Deterministic synthetic Linear weight (torch shape [d_path, K]); store transposed.
    bound = 1.0 / (K ** 0.5)
    weight = jax.random.uniform(k_w, (d_path, K), jnp.float32, -bound, bound)
    weight_t = weight.T  # [K, d_path]
    scaler = jnp.float32(1.0)

    out = position_embedding(pos, paths, weight_t, scaler)
    out = jax.block_until_ready(out)

    # Reference check in plain JAX.
    pos_pad_ref = jnp.concatenate([pos, jnp.zeros((1, d_node), jnp.float32)], axis=0)
    ref = (pos_pad_ref[paths].reshape(n_node, k_path, K) * scaler) @ weight_t
    assert out.shape == (n_node, k_path, d_path)
    assert jnp.allclose(out, ref, atol=1e-5, rtol=1e-5)

    print("KERNEL_OK")
</pallas_src>

<mosaic_0001>
module attributes {stable_mosaic.version = 11 : i64} {
  func.func @_pos_embed_kernel(%arg0: i32, %arg1: memref<128x4xi32, #tpu.memory_space<vmem>>, %arg2: memref<4x128x32xf32, #tpu.memory_space<vmem>>, %arg3: memref<128x32xf32, #tpu.memory_space<vmem>>) attributes {dimension_semantics = [#tpu.dimension_semantics<parallel>], iteration_bounds = array<i64: 1>, scalar_prefetch = 0 : i64, scratch_operands = 0 : i64, tpu.core_type = #tpu.core_type<tc>, window_params = [{transform_indices = @transform_0, window_bounds = array<i64: 128, 4>}, {pipeline_mode = #tpu.pipeline_mode<synchronous>, transform_indices = @transform_1, window_bounds = array<i64: 4, 128, 32>}, {transform_indices = @transform_2, window_bounds = array<i64: 128, 32>}]} {
    %0 = tpu.iota {dimensions = array<i32: 1>} : vector<128x128xi32>
    %cst = arith.constant 0.000000e+00 : f32
    %1 = vector.broadcast %cst : f32 to vector<128x32xf32>
    %c0 = arith.constant 0 : index
    %c0_0 = arith.constant 0 : index
    %2 = vector.load %arg1[%c0, %c0_0] : memref<128x4xi32, #tpu.memory_space<vmem>>, vector<128x1xi32>
    %3 = vector.broadcast %2 : vector<128x1xi32> to vector<128x128xi32>
    %4 = arith.cmpi eq, %0, %3 : vector<128x128xi32>
    %5 = arith.extui %4 : vector<128x128xi1> to vector<128x128xi32>
    %6 = arith.sitofp %5 : vector<128x128xi32> to vector<128x128xf32>
    %c0_1 = arith.constant 0 : index
    %c0_2 = arith.constant 0 : index
    %c0_3 = arith.constant 0 : index
    %7 = vector.load %arg2[%c0_1, %c0_2, %c0_3] : memref<4x128x32xf32, #tpu.memory_space<vmem>>, vector<1x128x32xf32>
    %8 = vector.shape_cast %7 : vector<1x128x32xf32> to vector<128x32xf32>
    %cst_4 = arith.constant dense<0.000000e+00> : vector<128x32xf32>
    %9 = tpu.matmul %6, %8, %cst_4 {dimension_numbers = #tpu.dot_dimension_numbers<[1], [0], [0], [1], [0, 0, 1, 1], [], []>} : vector<128x128xf32>, vector<128x32xf32>, vector<128x32xf32> -> vector<128x32xf32>
    %10 = arith.addf %1, %9 : vector<128x32xf32>
    %c0_5 = arith.constant 0 : index
    %c1 = arith.constant 1 : index
    %11 = vector.load %arg1[%c0_5, %c1] : memref<128x4xi32, #tpu.memory_space<vmem>>, vector<128x1xi32>
    %12 = vector.broadcast %11 : vector<128x1xi32> to vector<128x128xi32>
    %13 = arith.cmpi eq, %0, %12 : vector<128x128xi32>
    %14 = arith.extui %13 : vector<128x128xi1> to vector<128x128xi32>
    %15 = arith.sitofp %14 : vector<128x128xi32> to vector<128x128xf32>
    %c1_6 = arith.constant 1 : index
    %c0_7 = arith.constant 0 : index
    %c0_8 = arith.constant 0 : index
    %16 = vector.load %arg2[%c1_6, %c0_7, %c0_8] : memref<4x128x32xf32, #tpu.memory_space<vmem>>, vector<1x128x32xf32>
    %17 = vector.shape_cast %16 : vector<1x128x32xf32> to vector<128x32xf32>
    %cst_9 = arith.constant dense<0.000000e+00> : vector<128x32xf32>
    %18 = tpu.matmul %15, %17, %cst_9 {dimension_numbers = #tpu.dot_dimension_numbers<[1], [0], [0], [1], [0, 0, 1, 1], [], []>} : vector<128x128xf32>, vector<128x32xf32>, vector<128x32xf32> -> vector<128x32xf32>
    %19 = arith.addf %10, %18 : vector<128x32xf32>
    %c0_10 = arith.constant 0 : index
    %c2 = arith.constant 2 : index
    %20 = vector.load %arg1[%c0_10, %c2] : memref<128x4xi32, #tpu.memory_space<vmem>>, vector<128x1xi32>
    %21 = vector.broadcast %20 : vector<128x1xi32> to vector<128x128xi32>
    %22 = arith.cmpi eq, %0, %21 : vector<128x128xi32>
    %23 = arith.extui %22 : vector<128x128xi1> to vector<128x128xi32>
    %24 = arith.sitofp %23 : vector<128x128xi32> to vector<128x128xf32>
    %c2_11 = arith.constant 2 : index
    %c0_12 = arith.constant 0 : index
    %c0_13 = arith.constant 0 : index
    %25 = vector.load %arg2[%c2_11, %c0_12, %c0_13] : memref<4x128x32xf32, #tpu.memory_space<vmem>>, vector<1x128x32xf32>
    %26 = vector.shape_cast %25 : vector<1x128x32xf32> to vector<128x32xf32>
    %cst_14 = arith.constant dense<0.000000e+00> : vector<128x32xf32>
    %27 = tpu.matmul %24, %26, %cst_14 {dimension_numbers = #tpu.dot_dimension_numbers<[1], [0], [0], [1], [0, 0, 1, 1], [], []>} : vector<128x128xf32>, vector<128x32xf32>, vector<128x32xf32> -> vector<128x32xf32>
    %28 = arith.addf %19, %27 : vector<128x32xf32>
    %c0_15 = arith.constant 0 : index
    %c3 = arith.constant 3 : index
    %29 = vector.load %arg1[%c0_15, %c3] : memref<128x4xi32, #tpu.memory_space<vmem>>, vector<128x1xi32>
    %30 = vector.broadcast %29 : vector<128x1xi32> to vector<128x128xi32>
    %31 = arith.cmpi eq, %0, %30 : vector<128x128xi32>
    %32 = arith.extui %31 : vector<128x128xi1> to vector<128x128xi32>
    %33 = arith.sitofp %32 : vector<128x128xi32> to vector<128x128xf32>
    %c3_16 = arith.constant 3 : index
    %c0_17 = arith.constant 0 : index
    %c0_18 = arith.constant 0 : index
    %34 = vector.load %arg2[%c3_16, %c0_17, %c0_18] : memref<4x128x32xf32, #tpu.memory_space<vmem>>, vector<1x128x32xf32>
    %35 = vector.shape_cast %34 : vector<1x128x32xf32> to vector<128x32xf32>
    %cst_19 = arith.constant dense<0.000000e+00> : vector<128x32xf32>
    %36 = tpu.matmul %33, %35, %cst_19 {dimension_numbers = #tpu.dot_dimension_numbers<[1], [0], [0], [1], [0, 0, 1, 1], [], []>} : vector<128x128xf32>, vector<128x32xf32>, vector<128x32xf32> -> vector<128x32xf32>
    %37 = arith.addf %28, %36 : vector<128x32xf32>
    %c0_20 = arith.constant 0 : index
    %c0_21 = arith.constant 0 : index
    %38 = vector.load %arg3[%c0_20, %c0_21] : memref<128x32xf32, #tpu.memory_space<vmem>>, vector<128x32xf32>
    tpu.vector_store %arg3[%c0_20, %c0_21], %37 {strides = array<i32>} : memref<128x32xf32, #tpu.memory_space<vmem>>, vector<128x32xf32>,
    return
  }
  func.func @transform_0(%arg0: i32) -> (i32, i32) {
    %c0_i32 = arith.constant 0 : i32
    %c0_i32_0 = arith.constant 0 : i32
    return %arg0, %c0_i32 : i32, i32
  }
  func.func @transform_1(%arg0: i32) -> (i32, i32, i32) {
    %c0_i32 = arith.constant 0 : i32
    %c0_i32_0 = arith.constant 0 : i32
    %c0_i32_1 = arith.constant 0 : i32
    %c0_i32_2 = arith.constant 0 : i32
    return %c0_i32, %c0_i32_0, %c0_i32_1 : i32, i32, i32
  }
  func.func @transform_2(%arg0: i32) -> (i32, i32) {
    %c0_i32 = arith.constant 0 : i32
    %c0_i32_0 = arith.constant 0 : i32
    return %arg0, %c0_i32 : i32, i32
  }
}

</mosaic_0001>

<llo_original>
// kernel: tpu_custom_call.1
$region0: #{tpu_custom_call.1}
  #allocation0 [shape = 'u32[]', space=smem, size = 0x4, offset = 0x4, fixed_abs, tag = 'smem constant byte address 0x4 - core index']
  #allocation1 [shape = 'u32[144,128]{1,0:T(1,128)}', space=vmem, size = 0x12000, scoped, tag = 'internal scratch']
  %s0 = inlined_call_operand.vmem [shape: s32[128,4], index: 0, kind: input, shape index: {}]
  %s1 = inlined_call_operand.vmem [shape: f32[4,128,32], index: 1, kind: input, shape index: {}]
  %s2 = inlined_call_operand.vmem [shape: f32[128,32], index: 2, kind: output, shape index: {}]
  %s3 = sld [smem:[#allocation0]]
  $region18: #{tpu_custom_call.1} parent=0
    _
  %s5 = ssub.s32 1, %s3
  %s6 = scalar_select 0, %s5, %s3
  // Predicated region
  $region2: #{tpu_custom_call.1} parent=0 // pred_check
    _
  $region3: #{tpu_custom_call.1} parent=0 // pred_check_branch
    %8 = sbr.rel (0) target = $region5
  $region4: #{tpu_custom_call.1} parent=0 // pred_region
    _
  $region5: #{tpu_custom_call.1} parent=0 // pred_fallthru
    _
  // Predicated region
  $region6: #{tpu_custom_call.1} parent=0 // pred_check
    _
  $region7: #{tpu_custom_call.1} parent=0 // pred_check_branch
    %10 = sbr.rel (0) target = $region9
  $region8: #{tpu_custom_call.1} parent=0 // pred_region
    _
  $region9: #{tpu_custom_call.1} parent=0 // pred_fallthru
    _
  %v11 = vlaneseq
  %v12 = vand.u32 %v11, 127
  %v13 = vld [vmem:[%s0] sm:$0xff]
  %v14 = vld [vmem:[%s0 + $0x8] sm:$0xff]
  %v15 = vld [vmem:[%s0 + $0x10] sm:$0xff]
  %v16 = vld [vmem:[%s0 + $0x18] sm:$0xff]
  %v17 = vld [vmem:[%s0 + $0x20] sm:$0xff]
  %v18 = vld [vmem:[%s0 + $0x28] sm:$0xff]
  %v19 = vld [vmem:[%s0 + $0x30] sm:$0xff]
  %v20 = vld [vmem:[%s0 + $0x38] sm:$0xff]
  %v21 = vld [vmem:[%s0 + $0x40] sm:$0xff]
  %v22 = vld [vmem:[%s0 + $0x48] sm:$0xff]
  %v23 = vld [vmem:[%s0 + $0x50] sm:$0xff]
  %v24 = vld [vmem:[%s0 + $0x58] sm:$0xff]
  %v25 = vld [vmem:[%s0 + $0x60] sm:$0xff]
  %v26 = vld [vmem:[%s0 + $0x68] sm:$0xff]
  %v27 = vld [vmem:[%s0 + $0x70] sm:$0xff]
  %v28 = vld [vmem:[%s0 + $0x78] sm:$0xff]
  %29 = vset.pattern.permute.xlu0 0
  %30 = vperm.xlu0 %29, %v13
  %v31 = vpop.permute.xlu0 %30
  %32 = vset.pattern.permute.xlu0 0
  %33 = vperm.xlu0 %32, %v14
  %v34 = vpop.permute.xlu0 %33
  %35 = vset.pattern.permute.xlu0 0
  %36 = vperm.xlu0 %35, %v15
  %v37 = vpop.permute.xlu0 %36
  %38 = vset.pattern.permute.xlu0 0
  %39 = vperm.xlu0 %38, %v16
  %v40 = vpop.permute.xlu0 %39
  %41 = vset.pattern.permute.xlu0 0
  %42 = vperm.xlu0 %41, %v17
  %v43 = vpop.permute.xlu0 %42
  %44 = vset.pattern.permute.xlu0 0
  %45 = vperm.xlu0 %44, %v18
  %v46 = vpop.permute.xlu0 %45
  %47 = vset.pattern.permute.xlu0 0
  %48 = vperm.xlu0 %47, %v19
  %v49 = vpop.permute.xlu0 %48
  %50 = vset.pattern.permute.xlu0 0
  %51 = vperm.xlu0 %50, %v20
  %v52 = vpop.permute.xlu0 %51
  %53 = vset.pattern.permute.xlu0 0
  %54 = vperm.xlu0 %53, %v21
  %v55 = vpop.permute.xlu0 %54
  %56 = vset.pattern.permute.xlu0 0
  %57 = vperm.xlu0 %56, %v22
  %v58 = vpop.permute.xlu0 %57
  %59 = vset.pattern.permute.xlu0 0
  %60 = vperm.xlu0 %59, %v23
  %v61 = vpop.permute.xlu0 %60
  %62 = vset.pattern.permute.xlu0 0
  %63 = vperm.xlu0 %62, %v24
  %v64 = vpop.permute.xlu0 %63
  %65 = vset.pattern.permute.xlu0 0
  %66 = vperm.xlu0 %65, %v25
  %v67 = vpop.permute.xlu0 %66
  %68 = vset.pattern.permute.xlu0 0
  %69 = vperm.xlu0 %68, %v26
  %v70 = vpop.permute.xlu0 %69
  %71 = vset.pattern.permute.xlu0 0
  %72 = vperm.xlu0 %71, %v27
  %v73 = vpop.permute.xlu0 %72
  %74 = vset.pattern.permute.xlu0 0
  %75 = vperm.xlu0 %74, %v28
  %v76 = vpop.permute.xlu0 %75
  %vm77 = vcmp.eq.s32.totalorder %v12, %v31
  %vm78 = vcmp.eq.s32.totalorder %v12, %v34
  %vm79 = vcmp.eq.s32.totalorder %v12, %v37
  %vm80 = vcmp.eq.s32.totalorder %v12, %v40
  %vm81 = vcmp.eq.s32.totalorder %v12, %v43
  %vm82 = vcmp.eq.s32.totalorder %v12, %v46
  %vm83 = vcmp.eq.s32.totalorder %v12, %v49
  %vm84 = vcmp.eq.s32.totalorder %v12, %v52
  %vm85 = vcmp.eq.s32.totalorder %v12, %v55
  %vm86 = vcmp.eq.s32.totalorder %v12, %v58
  %vm87 = vcmp.eq.s32.totalorder %v12, %v61
  %vm88 = vcmp.eq.s32.totalorder %v12, %v64
  %vm89 = vcmp.eq.s32.totalorder %v12, %v67
  %vm90 = vcmp.eq.s32.totalorder %v12, %v70
  %vm91 = vcmp.eq.s32.totalorder %v12, %v73
  %vm92 = vcmp.eq.s32.totalorder %v12, %v76
  %v93 = vsel %vm77, 1, 0
  %v94 = vsel %vm78, 1, 0
  %v95 = vsel %vm79, 1, 0
  %v96 = vsel %vm80, 1, 0
  %v97 = vsel %vm81, 1, 0
  %v98 = vsel %vm82, 1, 0
  %v99 = vsel %vm83, 1, 0
  %v100 = vsel %vm84, 1, 0
  %v101 = vsel %vm85, 1, 0
  %v102 = vsel %vm86, 1, 0
  %v103 = vsel %vm87, 1, 0
  %v104 = vsel %vm88, 1, 0
  %v105 = vsel %vm89, 1, 0
  %v106 = vsel %vm90, 1, 0
  %v107 = vsel %vm91, 1, 0
  %v108 = vsel %vm92, 1, 0
  %v109 = vcvt.s32.f32 %v93
  %v110 = vcvt.s32.f32 %v94
  %v111 = vcvt.s32.f32 %v95
  %v112 = vcvt.s32.f32 %v96
  %v113 = vcvt.s32.f32 %v97
  %v114 = vcvt.s32.f32 %v98
  %v115 = vcvt.s32.f32 %v99
  %v116 = vcvt.s32.f32 %v100
  %v117 = vcvt.s32.f32 %v101
  %v118 = vcvt.s32.f32 %v102
  %v119 = vcvt.s32.f32 %v103
  %v120 = vcvt.s32.f32 %v104
  %v121 = vcvt.s32.f32 %v105
  %v122 = vcvt.s32.f32 %v106
  %v123 = vcvt.s32.f32 %v107
  %v124 = vcvt.s32.f32 %v108
  %v125 = vld [vmem:[%s1] sm:$0xff]
  %v126 = vld [vmem:[%s1 + $0x8] sm:$0xff]
  %v127 = vld [vmem:[%s1 + $0x10] sm:$0xff]
  %v128 = vld [vmem:[%s1 + $0x18] sm:$0xff]
  %v129 = vld [vmem:[%s1 + $0x20] sm:$0xff]
  %v130 = vld [vmem:[%s1 + $0x28] sm:$0xff]
  %v131 = vld [vmem:[%s1 + $0x30] sm:$0xff]
  %v132 = vld [vmem:[%s1 + $0x38] sm:$0xff]
  %v133 = vld [vmem:[%s1 + $0x40] sm:$0xff]
  %v134 = vld [vmem:[%s1 + $0x48] sm:$0xff]
  %v135 = vld [vmem:[%s1 + $0x50] sm:$0xff]
  %v136 = vld [vmem:[%s1 + $0x58] sm:$0xff]
  %v137 = vld [vmem:[%s1 + $0x60] sm:$0xff]
  %v138 = vld [vmem:[%s1 + $0x68] sm:$0xff]
  %v139 = vld [vmem:[%s1 + $0x70] sm:$0xff]
  %v140 = vld [vmem:[%s1 + $0x78] sm:$0xff]
  %141 = vset.pattern.permute.xlu0 1
  %142 = vperm.xlu0 %141, %v13
  %v143 = vpop.permute.xlu0 %142
  %144 = vset.pattern.permute.xlu0 1
  %145 = vperm.xlu0 %144, %v14
  %v146 = vpop.permute.xlu0 %145
  %147 = vset.pattern.permute.xlu0 1
  %148 = vperm.xlu0 %147, %v15
  %v149 = vpop.permute.xlu0 %148
  %150 = vset.pattern.permute.xlu0 1
  %151 = vperm.xlu0 %150, %v16
  %v152 = vpop.permute.xlu0 %151
  %153 = vset.pattern.permute.xlu0 1
  %154 = vperm.xlu0 %153, %v17
  %v155 = vpop.permute.xlu0 %154
  %156 = vset.pattern.permute.xlu0 1
  %157 = vperm.xlu0 %156, %v18
  %v158 = vpop.permute.xlu0 %157
  %159 = vset.pattern.permute.xlu0 1
  %160 = vperm.xlu0 %159, %v19
  %v161 = vpop.permute.xlu0 %160
  %162 = vset.pattern.permute.xlu0 1
  %163 = vperm.xlu0 %162, %v20
  %v164 = vpop.permute.xlu0 %163
  %165 = vset.pattern.permute.xlu0 1
  %166 = vperm.xlu0 %165, %v21
  %v167 = vpop.permute.xlu0 %166
  %168 = vset.pattern.permute.xlu0 1
  %169 = vperm.xlu0 %168, %v22
  %v170 = vpop.permute.xlu0 %169
  %171 = vset.pattern.permute.xlu0 1
  %172 = vperm.xlu0 %171, %v23
  %v173 = vpop.permute.xlu0 %172
  %174 = vset.pattern.permute.xlu0 1
  %175 = vperm.xlu0 %174, %v24
  %v176 = vpop.permute.xlu0 %175
  %177 = vset.pattern.permute.xlu0 1
  %178 = vperm.xlu0 %177, %v25
  %v179 = vpop.permute.xlu0 %178
  %180 = vset.pattern.permute.xlu0 1
  %181 = vperm.xlu0 %180, %v26
  %v182 = vpop.permute.xlu0 %181
  %183 = vset.pattern.permute.xlu0 1
  %184 = vperm.xlu0 %183, %v27
  %v185 = vpop.permute.xlu0 %184
  %186 = vset.pattern.permute.xlu0 1
  %187 = vperm.xlu0 %186, %v28
  %v188 = vpop.permute.xlu0 %187
  %vm189 = vcmp.eq.s32.totalorder %v12, %v143
  %vm190 = vcmp.eq.s32.totalorder %v12, %v146
  %vm191 = vcmp.eq.s32.totalorder %v12, %v149
  %vm192 = vcmp.eq.s32.totalorder %v12, %v152
  %vm193 = vcmp.eq.s32.totalorder %v12, %v155
  %vm194 = vcmp.eq.s32.totalorder %v12, %v158
  %vm195 = vcmp.eq.s32.totalorder %v12, %v161
  %vm196 = vcmp.eq.s32.totalorder %v12, %v164
  %vm197 = vcmp.eq.s32.totalorder %v12, %v167
  %vm198 = vcmp.eq.s32.totalorder %v12, %v170
  %vm199 = vcmp.eq.s32.totalorder %v12, %v173
  %vm200 = vcmp.eq.s32.totalorder %v12, %v176
  %vm201 = vcmp.eq.s32.totalorder %v12, %v179
  %vm202 = vcmp.eq.s32.totalorder %v12, %v182
  %vm203 = vcmp.eq.s32.totalorder %v12, %v185
  %vm204 = vcmp.eq.s32.totalorder %v12, %v188
  %v205 = vsel %vm189, 1, 0
  %v206 = vsel %vm190, 1, 0
  %v207 = vsel %vm191, 1, 0
  %v208 = vsel %vm192, 1, 0
  %v209 = vsel %vm193, 1, 0
  %v210 = vsel %vm194, 1, 0
  %v211 = vsel %vm195, 1, 0
  %v212 = vsel %vm196, 1, 0
  %v213 = vsel %vm197, 1, 0
  %v214 = vsel %vm198, 1, 0
  %v215 = vsel %vm199, 1, 0
  %v216 = vsel %vm200, 1, 0
  %v217 = vsel %vm201, 1, 0
  %v218 = vsel %vm202, 1, 0
  %v219 = vsel %vm203, 1, 0
  %v220 = vsel %vm204, 1, 0
  %v221 = vcvt.s32.f32 %v205
  %v222 = vcvt.s32.f32 %v206
  %v223 = vcvt.s32.f32 %v207
  %v224 = vcvt.s32.f32 %v208
  %v225 = vcvt.s32.f32 %v209
  %v226 = vcvt.s32.f32 %v210
  %v227 = vcvt.s32.f32 %v211
  %v228 = vcvt.s32.f32 %v212
  %v229 = vcvt.s32.f32 %v213
  %v230 = vcvt.s32.f32 %v214
  %v231 = vcvt.s32.f32 %v215
  %v232 = vcvt.s32.f32 %v216
  %v233 = vcvt.s32.f32 %v217
  %v234 = vcvt.s32.f32 %v218
  %v235 = vcvt.s32.f32 %v219
  %v236 = vcvt.s32.f32 %v220
  %s237 = scalar_lea.vmem %s1, 128
  %v238 = vld [vmem:[%s237] sm:$0xff]
  %v239 = vld [vmem:[%s237 + $0x8] sm:$0xff]
  %v240 = vld [vmem:[%s237 + $0x10] sm:$0xff]
  %v241 = vld [vmem:[%s237 + $0x18] sm:$0xff]
  %v242 = vld [vmem:[%s237 + $0x20] sm:$0xff]
  %v243 = vld [vmem:[%s237 + $0x28] sm:$0xff]
  %v244 = vld [vmem:[%s237 + $0x30] sm:$0xff]
  %v245 = vld [vmem:[%s237 + $0x38] sm:$0xff]
  %v246 = vld [vmem:[%s237 + $0x40] sm:$0xff]
  %v247 = vld [vmem:[%s237 + $0x48] sm:$0xff]
  %v248 = vld [vmem:[%s237 + $0x50] sm:$0xff]
  %v249 = vld [vmem:[%s237 + $0x58] sm:$0xff]
  %v250 = vld [vmem:[%s237 + $0x60] sm:$0xff]
  %v251 = vld [vmem:[%s237 + $0x68] sm:$0xff]
  %v252 = vld [vmem:[%s237 + $0x70] sm:$0xff]
  %v253 = vld [vmem:[%s237 + $0x78] sm:$0xff]
  %254 = vmatprep.subr.mxu0 0.0
  %255 = vmatpush1.msra.mxu0 %v238
  %256 = vmatprep.subr.mxu0 0.0
  %257 = vmatpush1.msra.mxu0 %v239
  %258 = vmatprep.subr.mxu0 0.0
  %259 = vmatpush1.msra.mxu0 %v240
  %260 = vmatprep.subr.mxu0 0.0
  %261 = vmatpush1.msra.mxu0 %v241
  %262 = vmatprep.subr.mxu0 0.0
  %263 = vmatpush1.msra.mxu0 %v242
  %264 = vmatprep.subr.mxu0 0.0
  %265 = vmatpush1.msra.mxu0 %v243
  %266 = vmatprep.subr.mxu0 0.0
  %267 = vmatpush1.msra.mxu0 %v244
  %268 = vmatprep.subr.mxu0 0.0
  %269 = vmatpush1.msra.mxu0 %v245
  %270 = vmatprep.subr.mxu0 0.0
  %271 = vmatpush1.msra.mxu0 %v246
  %272 = vmatprep.subr.mxu0 0.0
  %273 = vmatpush1.msra.mxu0 %v247
  %274 = vmatprep.subr.mxu0 0.0
  %275 = vmatpush1.msra.mxu0 %v248
  %276 = vmatprep.subr.mxu0 0.0
  %277 = vmatpush1.msra.mxu0 %v249
  %278 = vmatprep.subr.mxu0 0.0
  %279 = vmatpush1.msra.mxu0 %v250
  %280 = vmatprep.subr.mxu0 0.0
  %281 = vmatpush1.msra.mxu0 %v251
  %282 = vmatprep.subr.mxu0 0.0
  %283 = vmatpush1.msra.mxu0 %v252
  %284 = vmatprep.subr.mxu0 0.0
  %285 = vmatpush1.msra.mxu0 %v253
  %286 = vmatprep.subr.mxu0 0.0
  %287 = vmatpush1.msra.mxu0 0.0
  %288 = vmatprep.subr.mxu0 0.0
  %289 = vmatpush1.msra.mxu0 0.0
  %290 = vmatprep.subr.mxu0 0.0
  %291 = vmatpush1.msra.mxu0 0.0
  %292 = vmatprep.subr.mxu0 0.0
  %293 = vmatpush1.msra.mxu0 0.0
  %294 = vmatprep.subr.mxu0 0.0
  %295 = vmatpush1.msra.mxu0 0.0
  %296 = vmatprep.subr.mxu0 0.0
  %297 = vmatpush1.msra.mxu0 0.0
  %298 = vmatprep.subr.mxu0 0.0
  %299 = vmatpush1.msra.mxu0 0.0
  %300 = vmatprep.subr.mxu0 0.0
  %301 = vmatpush1.msra.mxu0 0.0
  %302 = vmatprep.subr.mxu0 0.0
  %303 = vmatpush1.msra.mxu0 0.0
  %304 = vmatprep.subr.mxu0 0.0
  %305 = vmatpush1.msra.mxu0 0.0
  %306 = vmatprep.subr.mxu0 0.0
  %307 = vmatpush1.msra.mxu0 0.0
  %308 = vmatprep.subr.mxu0 0.0
  %309 = vmatpush1.msra.mxu0 0.0
  %310 = vmatprep.subr.mxu0 0.0
  %311 = vmatpush1.msra.mxu0 0.0
  %312 = vmatprep.subr.mxu0 0.0
  %313 = vmatpush1.msra.mxu0 0.0
  %314 = vmatprep.subr.mxu0 0.0
  %315 = vmatpush1.msra.mxu0 0.0
  %316 = vmatprep.subr.mxu0 0.0
  %317 = vmatpush1.msra.mxu0 0.0
  %318 = vmatprep.mubr.f32.mxu0 0.0
  %319 = vmatmul.mubr.f32.gmra.mrb[0].mxu0 %v221
  %v320 = vpop.f32.mrb[0].mxu0
  %v321 = vadd.f32 0.0, %v320
  %v322 = vpop.f32.mrb[0].mxu0
  %323 = vmatprep.mubr.f32.mxu0 0.0
  %324 = vmatmul.mubr.f32.gmra.mrb[0].mxu0 %v222
  %v325 = vpop.f32.mrb[0].mxu0
  %v326 = vadd.f32 0.0, %v325
  %v327 = vpop.f32.mrb[0].mxu0
  %328 = vmatprep.mubr.f32.mxu0 0.0
  %329 = vmatmul.mubr.f32.gmra.mrb[0].mxu0 %v223
  %v330 = vpop.f32.mrb[0].mxu0
  %v331 = vadd.f32 0.0, %v330
  %v332 = vpop.f32.mrb[0].mxu0
  %333 = vmatprep.mubr.f32.mxu0 0.0
  %334 = vmatmul.mubr.f32.gmra.mrb[0].mxu0 %v224
  %v335 = vpop.f32.mrb[0].mxu0
  %v336 = vadd.f32 0.0, %v335
  %v337 = vpop.f32.mrb[0].mxu0
  %338 = vmatprep.mubr.f32.mxu0 0.0
  %339 = vmatmul.mubr.f32.gmra.mrb[0].mxu0 %v225
  %v340 = vpop.f32.mrb[0].mxu0
  %v341 = vadd.f32 0.0, %v340
  %v342 = vpop.f32.mrb[0].mxu0
  %343 = vmatprep.mubr.f32.mxu0 0.0
  %344 = vmatmul.mubr.f32.gmra.mrb[0].mxu0 %v226
  %v345 = vpop.f32.mrb[0].mxu0
  %v346 = vadd.f32 0.0, %v345
  %v347 = vpop.f32.mrb[0].mxu0
  %348 = vmatprep.mubr.f32.mxu0 0.0
  %349 = vmatmul.mubr.f32.gmra.mrb[0].mxu0 %v227
  %v350 = vpop.f32.mrb[0].mxu0
  %v351 = vadd.f32 0.0, %v350
  %v352 = vpop.f32.mrb[0].mxu0
  %353 = vmatprep.mubr.f32.mxu0 0.0
  %354 = vmatmul.mubr.f32.gmra.mrb[0].mxu0 %v228
  %v355 = vpop.f32.mrb[0].mxu0
  %v356 = vadd.f32 0.0, %v355
  %v357 = vpop.f32.mrb[0].mxu0
  %358 = vmatprep.mubr.f32.mxu0 0.0
  %359 = vmatmul.mubr.f32.gmra.mrb[0].mxu0 %v229
  %v360 = vpop.f32.mrb[0].mxu0
  %v361 = vadd.f32 0.0, %v360
  %v362 = vpop.f32.mrb[0].mxu0
  %363 = vmatprep.mubr.f32.mxu0 0.0
  %364 = vmatmul.mubr.f32.gmra.mrb[0].mxu0 %v230
  %v365 = vpop.f32.mrb[0].mxu0
  %v366 = vadd.f32 0.0, %v365
  %v367 = vpop.f32.mrb[0].mxu0
  %368 = vmatprep.mubr.f32.mxu0 0.0
  %369 = vmatmul.mubr.f32.gmra.mrb[0].mxu0 %v231
  %v370 = vpop.f32.mrb[0].mxu0
  %v371 = vadd.f32 0.0, %v370
  %v372 = vpop.f32.mrb[0].mxu0
  %373 = vmatprep.mubr.f32.mxu0 0.0
  %374 = vmatmul.mubr.f32.gmra.mrb[0].mxu0 %v232
  %v375 = vpop.f32.mrb[0].mxu0
  %v376 = vadd.f32 0.0, %v375
  %v377 = vpop.f32.mrb[0].mxu0
  %378 = vmatprep.mubr.f32.mxu0 0.0
  %379 = vmatmul.mubr.f32.gmra.mrb[0].mxu0 %v233
  %v380 = vpop.f32.mrb[0].mxu0
  %v381 = vadd.f32 0.0, %v380
  %v382 = vpop.f32.mrb[0].mxu0
  %383 = vmatprep.mubr.f32.mxu0 0.0
  %384 = vmatmul.mubr.f32.gmra.mrb[0].mxu0 %v234
  %v385 = vpop.f32.mrb[0].mxu0
  %v386 = vadd.f32 0.0, %v385
  %v387 = vpop.f32.mrb[0].mxu0
  %388 = vmatprep.mubr.f32.mxu0 0.0
  %389 = vmatmul.mubr.f32.gmra.mrb[0].mxu0 %v235
  %v390 = vpop.f32.mrb[0].mxu0
  %v391 = vadd.f32 0.0, %v390
  %v392 = vpop.f32.mrb[0].mxu0
  %393 = vmatprep.mubr.f32.mxu0 0.0
  %394 = vmatmul.mubr.f32.gmra.mrb[0].mxu0 %v236
  %v395 = vpop.f32.mrb[0].mxu0
  %v396 = vadd.f32 0.0, %v395
  %v397 = vpop.f32.mrb[0].mxu0
  %398 = vdwg.mxu0
  %399 = vmatprep.subr.mxu0 0.0
  %400 = vmatpush1.msra.mxu0 %v125
  %401 = vmatprep.subr.mxu0 0.0
  %402 = vmatpush1.msra.mxu0 %v126
  %403 = vmatprep.subr.mxu0 0.0
  %404 = vmatpush1.msra.mxu0 %v127
  %405 = vmatprep.subr.mxu0 0.0
  %406 = vmatpush1.msra.mxu0 %v128
  %407 = vmatprep.subr.mxu0 0.0
  %408 = vmatpush1.msra.mxu0 %v129
  %409 = vmatprep.subr.mxu0 0.0
  %410 = vmatpush1.msra.mxu0 %v130
  %411 = vmatprep.subr.mxu0 0.0
  %412 = vmatpush1.msra.mxu0 %v131
  %413 = vmatprep.subr.mxu0 0.0
  %414 = vmatpush1.msra.mxu0 %v132
  %415 = vmatprep.subr.mxu0 0.0
  %416 = vmatpush1.msra.mxu0 %v133
  %417 = vmatprep.subr.mxu0 0.0
  %418 = vmatpush1.msra.mxu0 %v134
  %419 = vmatprep.subr.mxu0 0.0
  %420 = vmatpush1.msra.mxu0 %v135
  %421 = vmatprep.subr.mxu0 0.0
  %422 = vmatpush1.msra.mxu0 %v136
  %423 = vmatprep.subr.mxu0 0.0
  %424 = vmatpush1.msra.mxu0 %v137
  %425 = vmatprep.subr.mxu0 0.0
  %426 = vmatpush1.msra.mxu0 %v138
  %427 = vmatprep.subr.mxu0 0.0
  %428 = vmatpush1.msra.mxu0 %v139
  %429 = vmatprep.subr.mxu0 0.0
  %430 = vmatpush1.msra.mxu0 %v140
  %431 = vmatprep.subr.mxu0 0.0
  %432 = vmatpush1.msra.mxu0 0.0
  %433 = vmatprep.subr.mxu0 0.0
  %434 = vmatpush1.msra.mxu0 0.0
  %435 = vmatprep.subr.mxu0 0.0
  %436 = vmatpush1.msra.mxu0 0.0
  %437 = vmatprep.subr.mxu0 0.0
  %438 = vmatpush1.msra.mxu0 0.0
  %439 = vmatprep.subr.mxu0 0.0
  %440 = vmatpush1.msra.mxu0 0.0
  %441 = vmatprep.subr.mxu0 0.0
  %442 = vmatpush1.msra.mxu0 0.0
  %443 = vmatprep.subr.mxu0 0.0
  %444 = vmatpush1.msra.mxu0 0.0
  %445 = vmatprep.subr.mxu0 0.0
  %446 = vmatpush1.msra.mxu0 0.0
  %447 = vmatprep.subr.mxu0 0.0
  %448 = vmatpush1.msra.mxu0 0.0
  %449 = vmatprep.subr.mxu0 0.0
  %450 = vmatpush1.msra.mxu0 0.0
  %451 = vmatprep.subr.mxu0 0.0
  %452 = vmatpush1.msra.mxu0 0.0
  %453 = vmatprep.subr.mxu0 0.0
  %454 = vmatpush1.msra.mxu0 0.0
  %455 = vmatprep.subr.mxu0 0.0
  %456 = vmatpush1.msra.mxu0 0.0
  %457 = vmatprep.subr.mxu0 0.0
  %458 = vmatpush1.msra.mxu0 0.0
  %459 = vmatprep.subr.mxu0 0.0
  %460 = vmatpush1.msra.mxu0 0.0
  %461 = vmatprep.subr.mxu0 0.0
  %462 = vmatpush1.msra.mxu0 0.0
  %463 = vmatprep.mubr.f32.mxu0 0.0
  %464 = vmatmul.mubr.f32.gmra.mrb[0].mxu0 %v109
  %v465 = vpop.f32.mrb[0].mxu0
  %v466 = vadd.f32 %v321, %v465
  %v467 = vpop.f32.mrb[0].mxu0
  %468 = vmatprep.mubr.f32.mxu0 0.0
  %469 = vmatmul.mubr.f32.gmra.mrb[0].mxu0 %v110
  %v470 = vpop.f32.mrb[0].mxu0
  %v471 = vadd.f32 %v326, %v470
  %v472 = vpop.f32.mrb[0].mxu0
  %473 = vmatprep.mubr.f32.mxu0 0.0
  %474 = vmatmul.mubr.f32.gmra.mrb[0].mxu0 %v111
  %v475 = vpop.f32.mrb[0].mxu0
  %v476 = vadd.f32 %v331, %v475
  %v477 = vpop.f32.mrb[0].mxu0
  %478 = vmatprep.mubr.f32.mxu0 0.0
  %479 = vmatmul.mubr.f32.gmra.mrb[0].mxu0 %v112
  %v480 = vpop.f32.mrb[0].mxu0
  %v481 = vadd.f32 %v336, %v480
  %v482 = vpop.f32.mrb[0].mxu0
  %483 = vmatprep.mubr.f32.mxu0 0.0
  %484 = vmatmul.mubr.f32.gmra.mrb[0].mxu0 %v113
  %v485 = vpop.f32.mrb[0].mxu0
  %v486 = vadd.f32 %v341, %v485
  %v487 = vpop.f32.mrb[0].mxu0
  %488 = vmatprep.mubr.f32.mxu0 0.0
  %489 = vmatmul.mubr.f32.gmra.mrb[0].mxu0 %v114
  %v490 = vpop.f32.mrb[0].mxu0
  %v491 = vadd.f32 %v346, %v490
  %v492 = vpop.f32.mrb[0].mxu0
  %493 = vmatprep.mubr.f32.mxu0 0.0
  %494 = vmatmul.mubr.f32.gmra.mrb[0].mxu0 %v115
  %v495 = vpop.f32.mrb[0].mxu0
  %v496 = vadd.f32 %v351, %v495
  %v497 = vpop.f32.mrb[0].mxu0
  %498 = vmatprep.mubr.f32.mxu0 0.0
  %499 = vmatmul.mubr.f32.gmra.mrb[0].mxu0 %v116
  %v500 = vpop.f32.mrb[0].mxu0
  %v501 = vadd.f32 %v356, %v500
  %v502 = vpop.f32.mrb[0].mxu0
  %503 = vmatprep.mubr.f32.mxu0 0.0
  %504 = vmatmul.mubr.f32.gmra.mrb[0].mxu0 %v117
  %v505 = vpop.f32.mrb[0].mxu0
  %v506 = vadd.f32 %v361, %v505
  %v507 = vpop.f32.mrb[0].mxu0
  %508 = vmatprep.mubr.f32.mxu0 0.0
  %509 = vmatmul.mubr.f32.gmra.mrb[0].mxu0 %v118
  %v510 = vpop.f32.mrb[0].mxu0
  %v511 = vadd.f32 %v366, %v510
  %v512 = vpop.f32.mrb[0].mxu0
  %513 = vmatprep.mubr.f32.mxu0 0.0
  %514 = vmatmul.mubr.f32.gmra.mrb[0].mxu0 %v119
  %v515 = vpop.f32.mrb[0].mxu0
  %v516 = vadd.f32 %v371, %v515
  %v517 = vpop.f32.mrb[0].mxu0
  %518 = vmatprep.mubr.f32.mxu0 0.0
  %519 = vmatmul.mubr.f32.gmra.mrb[0].mxu0 %v120
  %v520 = vpop.f32.mrb[0].mxu0
  %v521 = vadd.f32 %v376, %v520
  %v522 = vpop.f32.mrb[0].mxu0
  %523 = vmatprep.mubr.f32.mxu0 0.0
  %524 = vmatmul.mubr.f32.gmra.mrb[0].mxu0 %v121
  %v525 = vpop.f32.mrb[0].mxu0
  %v526 = vadd.f32 %v381, %v525
  %v527 = vpop.f32.mrb[0].mxu0
  %528 = vmatprep.mubr.f32.mxu0 0.0
  %529 = vmatmul.mubr.f32.gmra.mrb[0].mxu0 %v122
  %v530 = vpop.f32.mrb[0].mxu0
  %v531 = vadd.f32 %v386, %v530
  %v532 = vpop.f32.mrb[0].mxu0
  %533 = vmatprep.mubr.f32.mxu0 0.0
  %534 = vmatmul.mubr.f32.gmra.mrb[0].mxu0 %v123
  %v535 = vpop.f32.mrb[0].mxu0
  %v536 = vadd.f32 %v391, %v535
  %v537 = vpop.f32.mrb[0].mxu0
  %538 = vmatprep.mubr.f32.mxu0 0.0
  %539 = vmatmul.mubr.f32.gmra.mrb[0].mxu0 %v124
  %v540 = vpop.f32.mrb[0].mxu0
  %v541 = vadd.f32 %v396, %v540
  %v542 = vpop.f32.mrb[0].mxu0
  %543 = vdwg.mxu0
  %544 = vset.pattern.permute.xlu0 2
  %545 = vperm.xlu0 %544, %v13
  %v546 = vpop.permute.xlu0 %545
  %547 = vset.pattern.permute.xlu0 2
  %548 = vperm.xlu0 %547, %v14
  %v549 = vpop.permute.xlu0 %548
  %550 = vset.pattern.permute.xlu0 2
  %551 = vperm.xlu0 %550, %v15
  %v552 = vpop.permute.xlu0 %551
  %553 = vset.pattern.permute.xlu0 2
  %554 = vperm.xlu0 %553, %v16
  %v555 = vpop.permute.xlu0 %554
  %556 = vset.pattern.permute.xlu0 2
  %557 = vperm.xlu0 %556, %v17
  %v558 = vpop.permute.xlu0 %557
  %559 = vset.pattern.permute.xlu0 2
  %560 = vperm.xlu0 %559, %v18
  %v561 = vpop.permute.xlu0 %560
  %562 = vset.pattern.permute.xlu0 2
  %563 = vperm.xlu0 %562, %v19
  %v564 = vpop.permute.xlu0 %563
  %565 = vset.pattern.permute.xlu0 2
  %566 = vperm.xlu0 %565, %v20
  %v567 = vpop.permute.xlu0 %566
  %568 = vset.pattern.permute.xlu0 2
  %569 = vperm.xlu0 %568, %v21
  %v570 = vpop.permute.xlu0 %569
  %571 = vset.pattern.permute.xlu0 2
  %572 = vperm.xlu0 %571, %v22
  %v573 = vpop.permute.xlu0 %572
  %574 = vset.pattern.permute.xlu0 2
  %575 = vperm.xlu0 %574, %v23
  %v576 = vpop.permute.xlu0 %575
  %577 = vset.pattern.permute.xlu0 2
  %578 = vperm.xlu0 %577, %v24
  %v579 = vpop.permute.xlu0 %578
  %580 = vset.pattern.permute.xlu0 2
  %581 = vperm.xlu0 %580, %v25
  %v582 = vpop.permute.xlu0 %581
  %583 = vset.pattern.permute.xlu0 2
  %584 = vperm.xlu0 %583, %v26
  %v585 = vpop.permute.xlu0 %584
  %586 = vset.pattern.permute.xlu0 2
  %587 = vperm.xlu0 %586, %v27
  %v588 = vpop.permute.xlu0 %587
  %589 = vset.pattern.permute.xlu0 2
  %590 = vperm.xlu0 %589, %v28
  %v591 = vpop.permute.xlu0 %590
  %vm592 = vcmp.eq.s32.totalorder %v12, %v546
  %vm593 = vcmp.eq.s32.totalorder %v12, %v549
  %vm594 = vcmp.eq.s32.totalorder %v12, %v552
  %vm595 = vcmp.eq.s32.totalorder %v12, %v555
  %vm596 = vcmp.eq.s32.totalorder %v12, %v558
  %vm597 = vcmp.eq.s32.totalorder %v12, %v561
  %vm598 = vcmp.eq.s32.totalorder %v12, %v564
  %vm599 = vcmp.eq.s32.totalorder %v12, %v567
  %vm600 = vcmp.eq.s32.totalorder %v12, %v570
  %vm601 = vcmp.eq.s32.totalorder %v12, %v573
  %vm602 = vcmp.eq.s32.totalorder %v12, %v576
  %vm603 = vcmp.eq.s32.totalorder %v12, %v579
  %vm604 = vcmp.eq.s32.totalorder %v12, %v582
  %vm605 = vcmp.eq.s32.totalorder %v12, %v585
  %vm606 = vcmp.eq.s32.totalorder %v12, %v588
  %vm607 = vcmp.eq.s32.totalorder %v12, %v591
  %v608 = vsel %vm592, 1, 0
  %v609 = vsel %vm593, 1, 0
  %v610 = vsel %vm594, 1, 0
  %v611 = vsel %vm595, 1, 0
  %v612 = vsel %vm596, 1, 0
  %v613 = vsel %vm597, 1, 0
  %v614 = vsel %vm598, 1, 0
  %v615 = vsel %vm599, 1, 0
  %v616 = vsel %vm600, 1, 0
  %v617 = vsel %vm601, 1, 0
  %v618 = vsel %vm602, 1, 0
  %v619 = vsel %vm603, 1, 0
  %v620 = vsel %vm604, 1, 0
  %v621 = vsel %vm605, 1, 0
  %v622 = vsel %vm606, 1, 0
  %v623 = vsel %vm607, 1, 0
  %v624 = vcvt.s32.f32 %v608
  %v625 = vcvt.s32.f32 %v609
  %v626 = vcvt.s32.f32 %v610
  %v627 = vcvt.s32.f32 %v611
  %v628 = vcvt.s32.f32 %v612
  %v629 = vcvt.s32.f32 %v613
  %v630 = vcvt.s32.f32 %v614
  %v631 = vcvt.s32.f32 %v615
  %v632 = vcvt.s32.f32 %v616
  %v633 = vcvt.s32.f32 %v617
  %v634 = vcvt.s32.f32 %v618
  %v635 = vcvt.s32.f32 %v619
  %v636 = vcvt.s32.f32 %v620
  %v637 = vcvt.s32.f32 %v621
  %v638 = vcvt.s32.f32 %v622
  %v639 = vcvt.s32.f32 %v623
  %s640 = scalar_lea.vmem %s1, 256
  %v641 = vld [vmem:[%s640] sm:$0xff]
  %v642 = vld [vmem:[%s640 + $0x8] sm:$0xff]
  %v643 = vld [vmem:[%s640 + $0x10] sm:$0xff]
  %v644 = vld [vmem:[%s640 + $0x18] sm:$0xff]
  %v645 = vld [vmem:[%s640 + $0x20] sm:$0xff]
  %v646 = vld [vmem:[%s640 + $0x28] sm:$0xff]
  %v647 = vld [vmem:[%s640 + $0x30] sm:$0xff]
  %v648 = vld [vmem:[%s640 + $0x38] sm:$0xff]
  %v649 = vld [vmem:[%s640 + $0x40] sm:$0xff]
  %v650 = vld [vmem:[%s640 + $0x48] sm:$0xff]
  %v651 = vld [vmem:[%s640 + $0x50] sm:$0xff]
  %v652 = vld [vmem:[%s640 + $0x58] sm:$0xff]
  %v653 = vld [vmem:[%s640 + $0x60] sm:$0xff]
  %v654 = vld [vmem:[%s640 + $0x68] sm:$0xff]
  %v655 = vld [vmem:[%s640 + $0x70] sm:$0xff]
  %v656 = vld [vmem:[%s640 + $0x78] sm:$0xff]
  %657 = vmatprep.subr.mxu0 0.0
  %658 = vmatpush1.msra.mxu0 %v641
  %659 = vmatprep.subr.mxu0 0.0
  %660 = vmatpush1.msra.mxu0 %v642
  %661 = vmatprep.subr.mxu0 0.0
  %662 = vmatpush1.msra.mxu0 %v643
  %663 = vmatprep.subr.mxu0 0.0
  %664 = vmatpush1.msra.mxu0 %v644
  %665 = vmatprep.subr.mxu0 0.0
  %666 = vmatpush1.msra.mxu0 %v645
  %667 = vmatprep.subr.mxu0 0.0
  %668 = vmatpush1.msra.mxu0 %v646
  %669 = vmatprep.subr.mxu0 0.0
  %670 = vmatpush1.msra.mxu0 %v647
  %671 = vmatprep.subr.mxu0 0.0
  %672 = vmatpush1.msra.mxu0 %v648
  %673 = vmatprep.subr.mxu0 0.0
  %674 = vmatpush1.msra.mxu0 %v649
  %675 = vmatprep.subr.mxu0 0.0
  %676 = vmatpush1.msra.mxu0 %v650
  %677 = vmatprep.subr.mxu0 0.0
  %678 = vmatpush1.msra.mxu0 %v651
  %679 = vmatprep.subr.mxu0 0.0
  %680 = vmatpush1.msra.mxu0 %v652
  %681 = vmatprep.subr.mxu0 0.0
  %682 = vmatpush1.msra.mxu0 %v653
  %683 = vmatprep.subr.mxu0 0.0
  %684 = vmatpush1.msra.mxu0 %v654
  %685 = vmatprep.subr.mxu0 0.0
  %686 = vmatpush1.msra.mxu0 %v655
  %687 = vmatprep.subr.mxu0 0.0
  %688 = vmatpush1.msra.mxu0 %v656
  %689 = vmatprep.subr.mxu0 0.0
  %690 = vmatpush1.msra.mxu0 0.0
  %691 = vmatprep.subr.mxu0 0.0
  %692 = vmatpush1.msra.mxu0 0.0
  %693 = vmatprep.subr.mxu0 0.0
  %694 = vmatpush1.msra.mxu0 0.0
  %695 = vmatprep.subr.mxu0 0.0
  %696 = vmatpush1.msra.mxu0 0.0
  %697 = vmatprep.subr.mxu0 0.0
  %698 = vmatpush1.msra.mxu0 0.0
  %699 = vmatprep.subr.mxu0 0.0
  %700 = vmatpush1.msra.mxu0 0.0
  %701 = vmatprep.subr.mxu0 0.0
  %702 = vmatpush1.msra.mxu0 0.0
  %703 = vmatprep.subr.mxu0 0.0
  %704 = vmatpush1.msra.mxu0 0.0
  %705 = vmatprep.subr.mxu0 0.0
  %706 = vmatpush1.msra.mxu0 0.0
  %707 = vmatprep.subr.mxu0 0.0
  %708 = vmatpush1.msra.mxu0 0.0
  %709 = vmatprep.subr.mxu0 0.0
  %710 = vmatpush1.msra.mxu0 0.0
  %711 = vmatprep.subr.mxu0 0.0
  %712 = vmatpush1.msra.mxu0 0.0
  %713 = vmatprep.subr.mxu0 0.0
  %714 = vmatpush1.msra.mxu0 0.0
  %715 = vmatprep.subr.mxu0 0.0
  %716 = vmatpush1.msra.mxu0 0.0
  %717 = vmatprep.subr.mxu0 0.0
  %718 = vmatpush1.msra.mxu0 0.0
  %719 = vmatprep.subr.mxu0 0.0
  %720 = vmatpush1.msra.mxu0 0.0
  %721 = vmatprep.mubr.f32.mxu0 0.0
  %722 = vmatmul.mubr.f32.gmra.mrb[0].mxu0 %v624
  %v723 = vpop.f32.mrb[0].mxu0
  %v724 = vadd.f32 0.0, %v723
  %v725 = vpop.f32.mrb[0].mxu0
  %726 = vmatprep.mubr.f32.mxu0 0.0
  %727 = vmatmul.mubr.f32.gmra.mrb[0].mxu0 %v625
  %v728 = vpop.f32.mrb[0].mxu0
  %v729 = vadd.f32 0.0, %v728
  %v730 = vpop.f32.mrb[0].mxu0
  %731 = vmatprep.mubr.f32.mxu0 0.0
  %732 = vmatmul.mubr.f32.gmra.mrb[0].mxu0 %v626
  %v733 = vpop.f32.mrb[0].mxu0
  %v734 = vadd.f32 0.0, %v733
  %v735 = vpop.f32.mrb[0].mxu0
  %736 = vmatprep.mubr.f32.mxu0 0.0
  %737 = vmatmul.mubr.f32.gmra.mrb[0].mxu0 %v627
  %v738 = vpop.f32.mrb[0].mxu0
  %v739 = vadd.f32 0.0, %v738
  %v740 = vpop.f32.mrb[0].mxu0
  %741 = vmatprep.mubr.f32.mxu0 0.0
  %742 = vmatmul.mubr.f32.gmra.mrb[0].mxu0 %v628
  %v743 = vpop.f32.mrb[0].mxu0
  %v744 = vadd.f32 0.0, %v743
  %v745 = vpop.f32.mrb[0].mxu0
  %746 = vmatprep.mubr.f32.mxu0 0.0
  %747 = vmatmul.mubr.f32.gmra.mrb[0].mxu0 %v629
  %v748 = vpop.f32.mrb[0].mxu0
  %v749 = vadd.f32 0.0, %v748
  %v750 = vpop.f32.mrb[0].mxu0
  %751 = vmatprep.mubr.f32.mxu0 0.0
  %752 = vmatmul.mubr.f32.gmra.mrb[0].mxu0 %v630
  %v753 = vpop.f32.mrb[0].mxu0
  %v754 = vadd.f32 0.0, %v753
  %v755 = vpop.f32.mrb[0].mxu0
  %756 = vmatprep.mubr.f32.mxu0 0.0
  %757 = vmatmul.mubr.f32.gmra.mrb[0].mxu0 %v631
  %v758 = vpop.f32.mrb[0].mxu0
  %v759 = vadd.f32 0.0, %v758
  %v760 = vpop.f32.mrb[0].mxu0
  %761 = vmatprep.mubr.f32.mxu0 0.0
  %762 = vmatmul.mubr.f32.gmra.mrb[0].mxu0 %v632
  %v763 = vpop.f32.mrb[0].mxu0
  %v764 = vadd.f32 0.0, %v763
  %v765 = vpop.f32.mrb[0].mxu0
  %766 = vmatprep.mubr.f32.mxu0 0.0
  %767 = vmatmul.mubr.f32.gmra.mrb[0].mxu0 %v633
  %v768 = vpop.f32.mrb[0].mxu0
  %v769 = vadd.f32 0.0, %v768
  %v770 = vpop.f32.mrb[0].mxu0
  %771 = vmatprep.mubr.f32.mxu0 0.0
  %772 = vmatmul.mubr.f32.gmra.mrb[0].mxu0 %v634
  %v773 = vpop.f32.mrb[0].mxu0
  %v774 = vadd.f32 0.0, %v773
  %v775 = vpop.f32.mrb[0].mxu0
  %776 = vmatprep.mubr.f32.mxu0 0.0
  %777 = vmatmul.mubr.f32.gmra.mrb[0].mxu0 %v635
  %v778 = vpop.f32.mrb[0].mxu0
  %v779 = vadd.f32 0.0, %v778
  %v780 = vpop.f32.mrb[0].mxu0
  %781 = vmatprep.mubr.f32.mxu0 0.0
  %782 = vmatmul.mubr.f32.gmra.mrb[0].mxu0 %v636
  %v783 = vpop.f32.mrb[0].mxu0
  %v784 = vadd.f32 0.0, %v783
  %v785 = vpop.f32.mrb[0].mxu0
  %786 = vmatprep.mubr.f32.mxu0 0.0
  %787 = vmatmul.mubr.f32.gmra.mrb[0].mxu0 %v637
  %v788 = vpop.f32.mrb[0].mxu0
  %v789 = vadd.f32 0.0, %v788
  %v790 = vpop.f32.mrb[0].mxu0
  %791 = vmatprep.mubr.f32.mxu0 0.0
  %792 = vmatmul.mubr.f32.gmra.mrb[0].mxu0 %v638
  %v793 = vpop.f32.mrb[0].mxu0
  %v794 = vadd.f32 0.0, %v793
  %v795 = vpop.f32.mrb[0].mxu0
  %796 = vmatprep.mubr.f32.mxu0 0.0
  %797 = vmatmul.mubr.f32.gmra.mrb[0].mxu0 %v639
  %v798 = vpop.f32.mrb[0].mxu0
  %v799 = vadd.f32 0.0, %v798
  %v800 = vpop.f32.mrb[0].mxu0
  %801 = vdwg.mxu0
  %v802 = vadd.f32 %v466, %v724
  %v803 = vadd.f32 %v471, %v729
  %v804 = vadd.f32 %v476, %v734
  %v805 = vadd.f32 %v481, %v739
  %v806 = vadd.f32 %v486, %v744
  %v807 = vadd.f32 %v491, %v749
  %v808 = vadd.f32 %v496, %v754
  %v809 = vadd.f32 %v501, %v759
  %v810 = vadd.f32 %v506, %v764
  %v811 = vadd.f32 %v511, %v769
  %v812 = vadd.f32 %v516, %v774
  %v813 = vadd.f32 %v521, %v779
  %v814 = vadd.f32 %v526, %v784
  %v815 = vadd.f32 %v531, %v789
  %v816 = vadd.f32 %v536, %v794
  %v817 = vadd.f32 %v541, %v799
  %818 = vset.pattern.permute.xlu0 3
  %819 = vperm.xlu0 %818, %v13
  %v820 = vpop.permute.xlu0 %819
  %821 = vset.pattern.permute.xlu0 3
  %822 = vperm.xlu0 %821, %v14
  %v823 = vpop.permute.xlu0 %822
  %824 = vset.pattern.permute.xlu0 3
  %825 = vperm.xlu0 %824, %v15
  %v826 = vpop.permute.xlu0 %825
  %827 = vset.pattern.permute.xlu0 3
  %828 = vperm.xlu0 %827, %v16
  %v829 = vpop.permute.xlu0 %828
  %830 = vset.pattern.permute.xlu0 3
  %831 = vperm.xlu0 %830, %v17
  %v832 = vpop.permute.xlu0 %831
  %833 = vset.pattern.permute.xlu0 3
  %834 = vperm.xlu0 %833, %v18
  %v835 = vpop.permute.xlu0 %834
  %836 = vset.pattern.permute.xlu0 3
  %837 = vperm.xlu0 %836, %v19
  %v838 = vpop.permute.xlu0 %837
  %839 = vset.pattern.permute.xlu0 3
  %840 = vperm.xlu0 %839, %v20
  %v841 = vpop.permute.xlu0 %840
  %842 = vset.pattern.permute.xlu0 3
  %843 = vperm.xlu0 %842, %v21
  %v844 = vpop.permute.xlu0 %843
  %845 = vset.pattern.permute.xlu0 3
  %846 = vperm.xlu0 %845, %v22
  %v847 = vpop.permute.xlu0 %846
  %848 = vset.pattern.permute.xlu0 3
  %849 = vperm.xlu0 %848, %v23
  %v850 = vpop.permute.xlu0 %849
  %851 = vset.pattern.permute.xlu0 3
  %852 = vperm.xlu0 %851, %v24
  %v853 = vpop.permute.xlu0 %852
  %854 = vset.pattern.permute.xlu0 3
  %855 = vperm.xlu0 %854, %v25
  %v856 = vpop.permute.xlu0 %855
  %857 = vset.pattern.permute.xlu0 3
  %858 = vperm.xlu0 %857, %v26
  %v859 = vpop.permute.xlu0 %858
  %860 = vset.pattern.permute.xlu0 3
  %861 = vperm.xlu0 %860, %v27
  %v862 = vpop.permute.xlu0 %861
  %863 = vset.pattern.permute.xlu0 3
  %864 = vperm.xlu0 %863, %v28
  %v865 = vpop.permute.xlu0 %864
  %vm866 = vcmp.eq.s32.totalorder %v12, %v820
  %vm867 = vcmp.eq.s32.totalorder %v12, %v823
  %vm868 = vcmp.eq.s32.totalorder %v12, %v826
  %vm869 = vcmp.eq.s32.totalorder %v12, %v829
  %vm870 = vcmp.eq.s32.totalorder %v12, %v832
  %vm871 = vcmp.eq.s32.totalorder %v12, %v835
  %vm872 = vcmp.eq.s32.totalorder %v12, %v838
  %vm873 = vcmp.eq.s32.totalorder %v12, %v841
  %vm874 = vcmp.eq.s32.totalorder %v12, %v844
  %vm875 = vcmp.eq.s32.totalorder %v12, %v847
  %vm876 = vcmp.eq.s32.totalorder %v12, %v850
  %vm877 = vcmp.eq.s32.totalorder %v12, %v853
  %vm878 = vcmp.eq.s32.totalorder %v12, %v856
  %vm879 = vcmp.eq.s32.totalorder %v12, %v859
  %vm880 = vcmp.eq.s32.totalorder %v12, %v862
  %vm881 = vcmp.eq.s32.totalorder %v12, %v865
  %v882 = vsel %vm866, 1, 0
  %v883 = vsel %vm867, 1, 0
  %v884 = vsel %vm868, 1, 0
  %v885 = vsel %vm869, 1, 0
  %v886 = vsel %vm870, 1, 0
  %v887 = vsel %vm871, 1, 0
  %v888 = vsel %vm872, 1, 0
  %v889 = vsel %vm873, 1, 0
  %v890 = vsel %vm874, 1, 0
  %v891 = vsel %vm875, 1, 0
  %v892 = vsel %vm876, 1, 0
  %v893 = vsel %vm877, 1, 0
  %v894 = vsel %vm878, 1, 0
  %v895 = vsel %vm879, 1, 0
  %v896 = vsel %vm880, 1, 0
  %v897 = vsel %vm881, 1, 0
  %v898 = vcvt.s32.f32 %v882
  %v899 = vcvt.s32.f32 %v883
  %v900 = vcvt.s32.f32 %v884
  %v901 = vcvt.s32.f32 %v885
  %v902 = vcvt.s32.f32 %v886
  %v903 = vcvt.s32.f32 %v887
  %v904 = vcvt.s32.f32 %v888
  %v905 = vcvt.s32.f32 %v889
  %v906 = vcvt.s32.f32 %v890
  %v907 = vcvt.s32.f32 %v891
  %v908 = vcvt.s32.f32 %v892
  %v909 = vcvt.s32.f32 %v893
  %v910 = vcvt.s32.f32 %v894
  %v911 = vcvt.s32.f32 %v895
  %v912 = vcvt.s32.f32 %v896
  %v913 = vcvt.s32.f32 %v897
  %s914 = scalar_lea.vmem %s1, 384
  %v915 = vld [vmem:[%s914] sm:$0xff]
  %v916 = vld [vmem:[%s914 + $0x8] sm:$0xff]
  %v917 = vld [vmem:[%s914 + $0x10] sm:$0xff]
  %v918 = vld [vmem:[%s914 + $0x18] sm:$0xff]
  %v919 = vld [vmem:[%s914 + $0x20] sm:$0xff]
  %v920 = vld [vmem:[%s914 + $0x28] sm:$0xff]
  %v921 = vld [vmem:[%s914 + $0x30] sm:$0xff]
  %v922 = vld [vmem:[%s914 + $0x38] sm:$0xff]
  %v923 = vld [vmem:[%s914 + $0x40] sm:$0xff]
  %v924 = vld [vmem:[%s914 + $0x48] sm:$0xff]
  %v925 = vld [vmem:[%s914 + $0x50] sm:$0xff]
  %v926 = vld [vmem:[%s914 + $0x58] sm:$0xff]
  %v927 = vld [vmem:[%s914 + $0x60] sm:$0xff]
  %v928 = vld [vmem:[%s914 + $0x68] sm:$0xff]
  %v929 = vld [vmem:[%s914 + $0x70] sm:$0xff]
  %v930 = vld [vmem:[%s914 + $0x78] sm:$0xff]
  %931 = vmatprep.subr.mxu0 0.0
  %932 = vmatpush1.msra.mxu0 %v915
  %933 = vmatprep.subr.mxu0 0.0
  %934 = vmatpush1.msra.mxu0 %v916
  %935 = vmatprep.subr.mxu0 0.0
  %936 = vmatpush1.msra.mxu0 %v917
  %937 = vmatprep.subr.mxu0 0.0
  %938 = vmatpush1.msra.mxu0 %v918
  %939 = vmatprep.subr.mxu0 0.0
  %940 = vmatpush1.msra.mxu0 %v919
  %941 = vmatprep.subr.mxu0 0.0
  %942 = vmatpush1.msra.mxu0 %v920
  %943 = vmatprep.subr.mxu0 0.0
  %944 = vmatpush1.msra.mxu0 %v921
  %945 = vmatprep.subr.mxu0 0.0
  %946 = vmatpush1.msra.mxu0 %v922
  %947 = vmatprep.subr.mxu0 0.0
  %948 = vmatpush1.msra.mxu0 %v923
  %949 = vmatprep.subr.mxu0 0.0
  %950 = vmatpush1.msra.mxu0 %v924
  %951 = vmatprep.subr.mxu0 0.0
  %952 = vmatpush1.msra.mxu0 %v925
  %953 = vmatprep.subr.mxu0 0.0
  %954 = vmatpush1.msra.mxu0 %v926
  %955 = vmatprep.subr.mxu0 0.0
  %956 = vmatpush1.msra.mxu0 %v927
  %957 = vmatprep.subr.mxu0 0.0
  %958 = vmatpush1.msra.mxu0 %v928
  %959 = vmatprep.subr.mxu0 0.0
  %960 = vmatpush1.msra.mxu0 %v929
  %961 = vmatprep.subr.mxu0 0.0
  %962 = vmatpush1.msra.mxu0 %v930
  %963 = vmatprep.subr.mxu0 0.0
  %964 = vmatpush1.msra.mxu0 0.0
  %965 = vmatprep.subr.mxu0 0.0
  %966 = vmatpush1.msra.mxu0 0.0
  %967 = vmatprep.subr.mxu0 0.0
  %968 = vmatpush1.msra.mxu0 0.0
  %969 = vmatprep.subr.mxu0 0.0
  %970 = vmatpush1.msra.mxu0 0.0
  %971 = vmatprep.subr.mxu0 0.0
  %972 = vmatpush1.msra.mxu0 0.0
  %973 = vmatprep.subr.mxu0 0.0
  %974 = vmatpush1.msra.mxu0 0.0
  %975 = vmatprep.subr.mxu0 0.0
  %976 = vmatpush1.msra.mxu0 0.0
  %977 = vmatprep.subr.mxu0 0.0
  %978 = vmatpush1.msra.mxu0 0.0
  %979 = vmatprep.subr.mxu0 0.0
  %980 = vmatpush1.msra.mxu0 0.0
  %981 = vmatprep.subr.mxu0 0.0
  %982 = vmatpush1.msra.mxu0 0.0
  %983 = vmatprep.subr.mxu0 0.0
  %984 = vmatpush1.msra.mxu0 0.0
  %985 = vmatprep.subr.mxu0 0.0
  %986 = vmatpush1.msra.mxu0 0.0
  %987 = vmatprep.subr.mxu0 0.0
  %988 = vmatpush1.msra.mxu0 0.0
  %989 = vmatprep.subr.mxu0 0.0
  %990 = vmatpush1.msra.mxu0 0.0
  %991 = vmatprep.subr.mxu0 0.0
  %992 = vmatpush1.msra.mxu0 0.0
  %993 = vmatprep.subr.mxu0 0.0
  %994 = vmatpush1.msra.mxu0 0.0
  %995 = vmatprep.mubr.f32.mxu0 0.0
  %996 = vmatmul.mubr.f32.gmra.mrb[0].mxu0 %v898
  %v997 = vpop.f32.mrb[0].mxu0
  %v998 = vadd.f32 0.0, %v997
  %v999 = vpop.f32.mrb[0].mxu0
  %1000 = vmatprep.mubr.f32.mxu0 0.0
  %1001 = vmatmul.mubr.f32.gmra.mrb[0].mxu0 %v899
  %v1002 = vpop.f32.mrb[0].mxu0
  %v1003 = vadd.f32 0.0, %v1002
  %v1004 = vpop.f32.mrb[0].mxu0
  %1005 = vmatprep.mubr.f32.mxu0 0.0
  %1006 = vmatmul.mubr.f32.gmra.mrb[0].mxu0 %v900
  %v1007 = vpop.f32.mrb[0].mxu0
  %v1008 = vadd.f32 0.0, %v1007
  %v1009 = vpop.f32.mrb[0].mxu0
  %1010 = vmatprep.mubr.f32.mxu0 0.0
  %1011 = vmatmul.mubr.f32.gmra.mrb[0].mxu0 %v901
  %v1012 = vpop.f32.mrb[0].mxu0
  %v1013 = vadd.f32 0.0, %v1012
  %v1014 = vpop.f32.mrb[0].mxu0
  %1015 = vmatprep.mubr.f32.mxu0 0.0
  %1016 = vmatmul.mubr.f32.gmra.mrb[0].mxu0 %v902
  %v1017 = vpop.f32.mrb[0].mxu0
  %v1018 = vadd.f32 0.0, %v1017
  %v1019 = vpop.f32.mrb[0].mxu0
  %1020 = vmatprep.mubr.f32.mxu0 0.0
  %1021 = vmatmul.mubr.f32.gmra.mrb[0].mxu0 %v903
  %v1022 = vpop.f32.mrb[0].mxu0
  %v1023 = vadd.f32 0.0, %v1022
  %v1024 = vpop.f32.mrb[0].mxu0
  %1025 = vmatprep.mubr.f32.mxu0 0.0
  %1026 = vmatmul.mubr.f32.gmra.mrb[0].mxu0 %v904
  %v1027 = vpop.f32.mrb[0].mxu0
  %v1028 = vadd.f32 0.0, %v1027
  %v1029 = vpop.f32.mrb[0].mxu0
  %1030 = vmatprep.mubr.f32.mxu0 0.0
  %1031 = vmatmul.mubr.f32.gmra.mrb[0].mxu0 %v905
  %v1032 = vpop.f32.mrb[0].mxu0
  %v1033 = vadd.f32 0.0, %v1032
  %v1034 = vpop.f32.mrb[0].mxu0
  %1035 = vmatprep.mubr.f32.mxu0 0.0
  %1036 = vmatmul.mubr.f32.gmra.mrb[0].mxu0 %v906
  %v1037 = vpop.f32.mrb[0].mxu0
  %v1038 = vadd.f32 0.0, %v1037
  %v1039 = vpop.f32.mrb[0].mxu0
  %1040 = vmatprep.mubr.f32.mxu0 0.0
  %1041 = vmatmul.mubr.f32.gmra.mrb[0].mxu0 %v907
  %v1042 = vpop.f32.mrb[0].mxu0
  %v1043 = vadd.f32 0.0, %v1042
  %v1044 = vpop.f32.mrb[0].mxu0
  %1045 = vmatprep.mubr.f32.mxu0 0.0
  %1046 = vmatmul.mubr.f32.gmra.mrb[0].mxu0 %v908
  %v1047 = vpop.f32.mrb[0].mxu0
  %v1048 = vadd.f32 0.0, %v1047
  %v1049 = vpop.f32.mrb[0].mxu0
  %1050 = vmatprep.mubr.f32.mxu0 0.0
  %1051 = vmatmul.mubr.f32.gmra.mrb[0].mxu0 %v909
  %v1052 = vpop.f32.mrb[0].mxu0
  %v1053 = vadd.f32 0.0, %v1052
  %v1054 = vpop.f32.mrb[0].mxu0
  %1055 = vmatprep.mubr.f32.mxu0 0.0
  %1056 = vmatmul.mubr.f32.gmra.mrb[0].mxu0 %v910
  %v1057 = vpop.f32.mrb[0].mxu0
  %v1058 = vadd.f32 0.0, %v1057
  %v1059 = vpop.f32.mrb[0].mxu0
  %1060 = vmatprep.mubr.f32.mxu0 0.0
  %1061 = vmatmul.mubr.f32.gmra.mrb[0].mxu0 %v911
  %v1062 = vpop.f32.mrb[0].mxu0
  %v1063 = vadd.f32 0.0, %v1062
  %v1064 = vpop.f32.mrb[0].mxu0
  %1065 = vmatprep.mubr.f32.mxu0 0.0
  %1066 = vmatmul.mubr.f32.gmra.mrb[0].mxu0 %v912
  %v1067 = vpop.f32.mrb[0].mxu0
  %v1068 = vadd.f32 0.0, %v1067
  %v1069 = vpop.f32.mrb[0].mxu0
  %1070 = vmatprep.mubr.f32.mxu0 0.0
  %1071 = vmatmul.mubr.f32.gmra.mrb[0].mxu0 %v913
  %v1072 = vpop.f32.mrb[0].mxu0
  %v1073 = vadd.f32 0.0, %v1072
  %v1074 = vpop.f32.mrb[0].mxu0
  %1075 = vdwg.mxu0
  %v1076 = vadd.f32 %v802, %v998
  %v1077 = vadd.f32 %v803, %v1003
  %v1078 = vadd.f32 %v804, %v1008
  %v1079 = vadd.f32 %v805, %v1013
  %v1080 = vadd.f32 %v806, %v1018
  %v1081 = vadd.f32 %v807, %v1023
  %v1082 = vadd.f32 %v808, %v1028
  %v1083 = vadd.f32 %v809, %v1033
  %v1084 = vadd.f32 %v810, %v1038
  %v1085 = vadd.f32 %v811, %v1043
  %v1086 = vadd.f32 %v812, %v1048
  %v1087 = vadd.f32 %v813, %v1053
  %v1088 = vadd.f32 %v814, %v1058
  %v1089 = vadd.f32 %v815, %v1063
  %v1090 = vadd.f32 %v816, %v1068
  %v1091 = vadd.f32 %v817, %v1073
  %vm1092 = vcmask 261120
  %1093 = vst.msk [vmem:[%s2] sm:$0xff] %vm1092, %v1076
  %1094 = vst.msk [vmem:[%s2 + $0x8] sm:$0xff] %vm1092, %v1077
  %1095 = vst.msk [vmem:[%s2 + $0x10] sm:$0xff] %vm1092, %v1078
  %1096 = vst.msk [vmem:[%s2 + $0x18] sm:$0xff] %vm1092, %v1079
  %1097 = vst.msk [vmem:[%s2 + $0x20] sm:$0xff] %vm1092, %v1080
  %1098 = vst.msk [vmem:[%s2 + $0x28] sm:$0xff] %vm1092, %v1081
  %1099 = vst.msk [vmem:[%s2 + $0x30] sm:$0xff] %vm1092, %v1082
  %1100 = vst.msk [vmem:[%s2 + $0x38] sm:$0xff] %vm1092, %v1083
  %1101 = vst.msk [vmem:[%s2 + $0x40] sm:$0xff] %vm1092, %v1084
  %1102 = vst.msk [vmem:[%s2 + $0x48] sm:$0xff] %vm1092, %v1085
  %1103 = vst.msk [vmem:[%s2 + $0x50] sm:$0xff] %vm1092, %v1086
  %1104 = vst.msk [vmem:[%s2 + $0x58] sm:$0xff] %vm1092, %v1087
  %1105 = vst.msk [vmem:[%s2 + $0x60] sm:$0xff] %vm1092, %v1088
  %1106 = vst.msk [vmem:[%s2 + $0x68] sm:$0xff] %vm1092, %v1089
  %1107 = vst.msk [vmem:[%s2 + $0x70] sm:$0xff] %vm1092, %v1090
  %1108 = vst.msk [vmem:[%s2 + $0x78] sm:$0xff] %vm1092, %v1091
  // Predicated region
  $region10: #{tpu_custom_call.1} parent=0 // pred_check
    _
  $region11: #{tpu_custom_call.1} parent=0 // pred_check_branch
    %1110 = sbr.rel (0) target = $region13
  $region12: #{tpu_custom_call.1} parent=0 // pred_region
    _
  $region13: #{tpu_custom_call.1} parent=0 // pred_fallthru
    _
  // Predicated region
  $region14: #{tpu_custom_call.1} parent=0 // pred_check
    _
  $region15: #{tpu_custom_call.1} parent=0 // pred_check_branch
    %1112 = sbr.rel (0) target = $region17
  $region16: #{tpu_custom_call.1} parent=0 // pred_region
    _
  $region17: #{tpu_custom_call.1} parent=0 // pred_fallthru
    _

</llo_original>
